<compile_context>
chip_gen: v6e
topology: v6e:2x2x1
jax: 0.10.0
libtpu: 0.0.40
codegen_flags: <defaults>
</compile_context>

<pallas_src>
import jax
import jax.numpy as jnp
from jax.experimental import pallas as pl
from jax.experimental.pallas import tpu as pltpu

# ----------------------------- config ---------------------------------------
HIDDEN = 32
BATCH = 2
SEQ = 8


# --------------------------- fused kernel ------------------------------------
def pooler_kernel(x_ref, w_ref, b_ref, o_ref):
    # x: (B, S, H) resident in VMEM; take the first token in-kernel.
    first = x_ref[:, 0, :]                       # (B, H)
    y = (
        jnp.dot(first, w_ref[...], preferred_element_type=jnp.float32)
        + b_ref[...]                             # (1, H) broadcasts over B
    )
    o_ref[...] = jnp.tanh(y)                     # EUP transcendental


def bert_pooler(hidden_states, w, b):
    """hidden_states: (B, S, H) f32; w: (H, H) stored (in, out); b: (H,)."""
    B, S, H = hidden_states.shape
    return pl.pallas_call(
        pooler_kernel,
        out_shape=jax.ShapeDtypeStruct((B, H), jnp.float32),
        in_specs=[
            pl.BlockSpec(memory_space=pltpu.MemorySpace.VMEM),  # whole x in VMEM
            pl.BlockSpec(memory_space=pltpu.MemorySpace.VMEM),  # W
            pl.BlockSpec(memory_space=pltpu.MemorySpace.VMEM),  # b
        ],
        out_specs=pl.BlockSpec(memory_space=pltpu.MemorySpace.VMEM),
    )(hidden_states, w, b.reshape(1, H))


# ------------------------------ main -----------------------------------------
if __name__ == "__main__":
    key0 = jax.random.PRNGKey(0)
    ks = jax.random.split(key0, 3)

    # Deterministic parameters; weight stored as (in, out) so y = x @ W + b,
    # equivalent to nn.Linear's x @ W_torch.T + b.
    scale = 1.0 / (HIDDEN ** 0.5)
    w = jax.random.normal(ks[0], (HIDDEN, HIDDEN), jnp.float32) * scale
    b = jax.random.normal(ks[1], (HIDDEN,), jnp.float32) * 0.01

    hidden_states = jax.random.normal(ks[2], (BATCH, SEQ, HIDDEN), jnp.float32)

    out = bert_pooler(hidden_states, w, b)
    jax.block_until_ready(out)

    # Pure-JAX reference check (same semantics as the PyTorch module).
    ref = jnp.tanh(hidden_states[:, 0] @ w + b)
    assert out.shape == (BATCH, HIDDEN)
    assert jnp.allclose(out, ref, atol=1e-5, rtol=1e-5)

    print("KERNEL_OK")
</pallas_src>

<mosaic_0001>
module attributes {stable_mosaic.version = 11 : i64} {
  func.func @pooler_kernel(%arg0: memref<2x8x32xf32, #tpu.memory_space<vmem>>, %arg1: memref<32x32xf32, #tpu.memory_space<vmem>>, %arg2: memref<1x32xf32, #tpu.memory_space<vmem>>, %arg3: memref<2x32xf32, #tpu.memory_space<vmem>>) attributes {dimension_semantics = [], scalar_prefetch = 0 : i64, scratch_operands = 0 : i64, tpu.core_type = #tpu.core_type<tc>} {
    %c0 = arith.constant 0 : index
    %c0_0 = arith.constant 0 : index
    %c0_1 = arith.constant 0 : index
    %0 = vector.load %arg0[%c0, %c0_0, %c0_1] : memref<2x8x32xf32, #tpu.memory_space<vmem>>, vector<2x1x32xf32>
    %1 = vector.shape_cast %0 : vector<2x1x32xf32> to vector<2x32xf32>
    %c0_2 = arith.constant 0 : index
    %c0_3 = arith.constant 0 : index
    %2 = vector.load %arg1[%c0_2, %c0_3] : memref<32x32xf32, #tpu.memory_space<vmem>>, vector<32x32xf32>
    %cst = arith.constant dense<0.000000e+00> : vector<2x32xf32>
    %3 = tpu.matmul %1, %2, %cst {dimension_numbers = #tpu.dot_dimension_numbers<[1], [0], [0], [1], [0, 0, 1, 1], [], []>} : vector<2x32xf32>, vector<32x32xf32>, vector<2x32xf32> -> vector<2x32xf32>
    %c0_4 = arith.constant 0 : index
    %c0_5 = arith.constant 0 : index
    %4 = vector.load %arg2[%c0_4, %c0_5] : memref<1x32xf32, #tpu.memory_space<vmem>>, vector<1x32xf32>
    %5 = vector.broadcast %4 : vector<1x32xf32> to vector<2x32xf32>
    %6 = arith.addf %3, %5 : vector<2x32xf32>
    %7 = math.tanh %6 : vector<2x32xf32>
    %c0_6 = arith.constant 0 : index
    %c0_7 = arith.constant 0 : index
    %8 = vector.load %arg3[%c0_6, %c0_7] : memref<2x32xf32, #tpu.memory_space<vmem>>, vector<2x32xf32>
    tpu.vector_store %arg3[%c0_6, %c0_7], %7 {strides = array<i32>} : memref<2x32xf32, #tpu.memory_space<vmem>>, vector<2x32xf32>,
    return
  }
}

</mosaic_0001>

<llo_original>
// kernel: tpu_custom_call.1
$region0: #{tpu_custom_call.1}
  #allocation0 [shape = 'u32[]', space=smem, size = 0x4, offset = 0x4, fixed_abs, tag = 'smem constant byte address 0x4 - core index']
  #allocation1 [shape = 'u32[144,128]{1,0:T(1,128)}', space=vmem, size = 0x12000, scoped, tag = 'internal scratch']
  %s0 = inlined_call_operand.hbm [shape: f32[2,8,32], index: 0, kind: input, shape index: {}]
  %s1 = inlined_call_operand.hbm [shape: f32[32,32], index: 1, kind: input, shape index: {}]
  %s2 = inlined_call_operand.vmem [shape: f32[1,32], index: 2, kind: input, shape index: {}]
  %s3 = inlined_call_operand.hbm [shape: f32[2,32], index: 3, kind: output, shape index: {}]
  %s4 = sld [smem:[#allocation0]]
  $region30: #{tpu_custom_call.1} parent=0
    _
  %s6 = ssub.s32 1, %s4
  %s7 = scalar_select 0, %s6, %s4
  $region1: #{tpu_custom_call.1} parent=0
    #allocation2 [shape = 'u8[8192]{0}', space=vmem, size = 0x2000, scoped, tag = 'input window, operand 0, single buffered']
    #allocation3 [shape = 's32[1]{0}', space=sflag, size = 0x4, scoped, tag = 'scoped memory for tpu_custom_call.1']
    #allocation4 [shape = 's32[1]{0}', space=sflag, size = 0x4, scoped, tag = 'scoped memory for tpu_custom_call.1']
    #allocation5 [shape = 'u8[16384]{0}', space=vmem, size = 0x4000, scoped, tag = 'input window, operand 1, single buffered']
    #allocation6 [shape = 's32[1]{0}', space=sflag, size = 0x4, scoped, tag = 'scoped memory for tpu_custom_call.1']
    #allocation7 [shape = 'u8[1024]{0}', space=vmem, size = 0x400, scoped, tag = 'output window, operand 0, single buffered']
    %8 = vsyncpa [#allocation3], 0
    %9 = vsyncpa [#allocation6], 0
    %10 = vsyncpa [#allocation4], 0
    // Predicated region
    $region2: #{tpu_custom_call.1} parent=1 // pred_check
      _
    $region3: #{tpu_custom_call.1} parent=1 // pred_check_branch
      %12 = sbr.rel (0) target = $region5
    $region4: #{tpu_custom_call.1} parent=1 // pred_region
      %s14 = ssub.s32 256, 256
      %15 = vsyncadd [#allocation3], %s14
      %s16 = sshll.u32 [#allocation2], 4
      %s17 = int_to_ptr.vmem [resolvable:$true] %s16
      %22 = dma.hbm_to_vmem [thread:$0]  %s0, 256, %s17, [#allocation3], 128, 128, 8
    $region5: #{tpu_custom_call.1} parent=1 // pred_fallthru
      _
    // Predicated region
    $region6: #{tpu_custom_call.1} parent=1 // pred_check
      _
    $region7: #{tpu_custom_call.1} parent=1 // pred_check_branch
      %24 = sbr.rel (0) target = $region9
    $region8: #{tpu_custom_call.1} parent=1 // pred_region
      %s26 = ssub.s32 512, 512
      %27 = vsyncadd [#allocation6], %s26
      %s28 = sshll.u32 [#allocation5], 4
      %s29 = int_to_ptr.vmem [resolvable:$true] %s28
      %34 = dma.hbm_to_vmem [thread:$0]  %s1, 512, %s29, [#allocation6], 128, 128, 8
    $region9: #{tpu_custom_call.1} parent=1 // pred_fallthru
      _
    // Predicated region
    $region10: #{tpu_custom_call.1} parent=1 // pred_check
      _
    $region11: #{tpu_custom_call.1} parent=1 // pred_check_branch
      %36 = sbr.rel (0) target = $region13
    $region12: #{tpu_custom_call.1} parent=1 // pred_region
      _
    $region13: #{tpu_custom_call.1} parent=1 // pred_fallthru
      _
    // Predicated region
    $region14: #{tpu_custom_call.1} parent=1 // pred_check
      _
    $region15: #{tpu_custom_call.1} parent=1 // pred_check_branch
      %38 = sbr.rel (0) target = $region17
    $region16: #{tpu_custom_call.1} parent=1 // pred_region
      %39 = dma.done [#allocation3], 256
    $region17: #{tpu_custom_call.1} parent=1 // pred_fallthru
      _
    // Predicated region
    $region18: #{tpu_custom_call.1} parent=1 // pred_check
      _
    $region19: #{tpu_custom_call.1} parent=1 // pred_check_branch
      %41 = sbr.rel (0) target = $region21
    $region20: #{tpu_custom_call.1} parent=1 // pred_region
      %42 = dma.done [#allocation6], 512
    $region21: #{tpu_custom_call.1} parent=1 // pred_fallthru
      _
    %v43 = vld [vmem:[#allocation2] sm:$0x1]
    %v44 = vld [vmem:[#allocation2 + $0x8] sm:$0x1]
    %v45 = vld [vmem:[#allocation5] sm:$0xff]
    %v46 = vld [vmem:[#allocation5 + $0x8] sm:$0xff]
    %v47 = vld [vmem:[#allocation5 + $0x10] sm:$0xff]
    %v48 = vld [vmem:[#allocation5 + $0x18] sm:$0xff]
    %v49 = vld [vmem:[%s2] sm:$0x1]
    %v51 = vlaneseq
    %v52 = vshrl.u32 %v51, 7
    %v53 = vsub.s32 0, %v52
    %v54 = vrot.slane %v49, %v53
    %v58 = vrot.slane %v44, 7
    %vm59 = vcmask 1041409
    %v60 = vsel %vm59, %v58, %v43
    %vm61 = vcmask 261120
    %v62 = vsel %vm61, %v60, 0
    %64 = vmatprep.subr.mxu0 0.0
    %65 = vmatpush1.msra.mxu0 0.0
    %66 = vmatprep.subr.mxu0 0.0
    %67 = vmatpush1.msra.mxu0 0.0
    %68 = vmatprep.subr.mxu0 0.0
    %69 = vmatpush1.msra.mxu0 0.0
    %70 = vmatprep.subr.mxu0 0.0
    %71 = vmatpush1.msra.mxu0 0.0
    %72 = vmatprep.subr.mxu0 0.0
    %73 = vmatpush1.msra.mxu0 0.0
    %74 = vmatprep.subr.mxu0 0.0
    %75 = vmatpush1.msra.mxu0 0.0
    %76 = vmatprep.subr.mxu0 0.0
    %77 = vmatpush1.msra.mxu0 0.0
    %78 = vmatprep.subr.mxu0 0.0
    %79 = vmatpush1.msra.mxu0 0.0
    %80 = vmatprep.subr.mxu0 0.0
    %81 = vmatpush1.msra.mxu0 0.0
    %82 = vmatprep.subr.mxu0 0.0
    %83 = vmatpush1.msra.mxu0 0.0
    %84 = vmatprep.subr.mxu0 0.0
    %85 = vmatpush1.msra.mxu0 0.0
    %86 = vmatprep.subr.mxu0 0.0
    %87 = vmatpush1.msra.mxu0 0.0
    %88 = vmatprep.subr.mxu0 0.0
    %89 = vmatpush1.msra.mxu0 %v48
    %90 = vmatprep.subr.mxu0 0.0
    %91 = vmatpush1.msra.mxu0 %v47
    %92 = vmatprep.subr.mxu0 0.0
    %93 = vmatpush1.msra.mxu0 %v46
    %94 = vmatprep.subr.mxu0 0.0
    %95 = vmatpush1.msra.mxu0 %v45
    %96 = vmatprep.subr.mxu0 0.0
    %97 = vmatpush2.msra.mxu0 0.0
    %98 = vmatprep.subr.mxu0 0.0
    %99 = vmatpush2.msra.mxu0 0.0
    %100 = vmatprep.subr.mxu0 0.0
    %101 = vmatpush2.msra.mxu0 0.0
    %102 = vmatprep.subr.mxu0 0.0
    %103 = vmatpush2.msra.mxu0 0.0
    %104 = vmatprep.subr.mxu0 0.0
    %105 = vmatpush2.msra.mxu0 0.0
    %106 = vmatprep.subr.mxu0 0.0
    %107 = vmatpush2.msra.mxu0 0.0
    %108 = vmatprep.subr.mxu0 0.0
    %109 = vmatpush2.msra.mxu0 0.0
    %110 = vmatprep.subr.mxu0 0.0
    %111 = vmatpush2.msra.mxu0 0.0
    %112 = vmatprep.subr.mxu0 0.0
    %113 = vmatpush2.msra.mxu0 0.0
    %114 = vmatprep.subr.mxu0 0.0
    %115 = vmatpush2.msra.mxu0 0.0
    %116 = vmatprep.subr.mxu0 0.0
    %117 = vmatpush2.msra.mxu0 0.0
    %118 = vmatprep.subr.mxu0 0.0
    %119 = vmatpush2.msra.mxu0 0.0
    %120 = vmatprep.subr.mxu0 0.0
    %121 = vmatpush2.msra.mxu0 0.0
    %122 = vmatprep.subr.mxu0 0.0
    %123 = vmatpush2.msra.mxu0 0.0
    %124 = vmatprep.subr.mxu0 0.0
    %125 = vmatpush2.msra.mxu0 0.0
    %126 = vmatprep.subr.mxu0 0.0
    %127 = vmatpush2.msra.mxu0 0.0
    %128 = vmatprep.mubr.f32.mxu0 0.0
    %129 = vmatmul.mubr.f32.gmra.mxu0 %v62
    %v130 = vpop.f32.mrf.mxu0
    %v131 = vadd.f32 %v54, %v130
    %v132 = vpop.f32.mrf.mxu0
    %133 = vdwg.mxu0
    %v134 = vtanh.pop %v131
    %vm135 = vcmask 254976
    %136 = vst.msk [vmem:[#allocation7] sm:$0x3] %vm135, %v134
    // Predicated region
    $region22: #{tpu_custom_call.1} parent=1 // pred_check
      _
    $region23: #{tpu_custom_call.1} parent=1 // pred_check_branch
      %138 = sbr.rel (0) target = $region25
    $region24: #{tpu_custom_call.1} parent=1 // pred_region
      %s140 = ssub.s32 32, 32
      %141 = vsyncadd [#allocation4], %s140
      %s143 = sshll.u32 [#allocation7], 4
      %s144 = int_to_ptr.vmem [resolvable:$true] %s143
      %146 = dma.vmem_to_hbm [thread:$0]  %s144, 32, %s3, [#allocation4]
    $region25: #{tpu_custom_call.1} parent=1 // pred_fallthru
      _
    // Predicated region
    $region26: #{tpu_custom_call.1} parent=1 // pred_check
      _
    $region27: #{tpu_custom_call.1} parent=1 // pred_check_branch
      %148 = sbr.rel (0) target = $region29
    $region28: #{tpu_custom_call.1} parent=1 // pred_region
      %149 = dma.done [#allocation4], 32
    $region29: #{tpu_custom_call.1} parent=1 // pred_fallthru
      _
    %150 = vsyncpa [#allocation3], 1
    %151 = vsyncpa [#allocation6], 1
    %152 = vsyncpa [#allocation4], 1

</llo_original>
